<compile_context>
chip_gen: v6e
topology: v6e:2x2x1
jax: 0.10.0
libtpu: 0.0.40
codegen_flags: <defaults>
</compile_context>

<pallas_src>
import functools
import numpy as np
import jax
import jax.numpy as jnp
from jax.experimental import pallas as pl
from jax.experimental.pallas import tpu as pltpu


# -----------------------------------------------------------------------------
# Fused kernel: per-batch style FC + modulation (once, s == 0) and modulated
# 1x1 conv + bias (+clamp) over one spatial tile.
#
#   w_ref     : (B, w_dim)        full / resident   latent vectors
#   fcw_ref   : (3, w_dim, C_in)  full / resident   StyleSplit FC weight (pre-reshaped)
#   fcb_ref   : (3, 1, C_in)      full / resident   StyleSplit FC bias
#   convw_ref : (C_out, C_in)     full / resident   1x1 conv weight
#   bias_ref  : (C_out, 1)        full / resident   output bias
#   x_ref     : (1, C_in, T)      per (b, s) spatial tile
#   o_ref     : (1, C_out, T)
#   wmod_ref  : (C_out, C_in)     VMEM scratch: per-batch modulated weight
# -----------------------------------------------------------------------------
def _torgb_kernel(w_ref, fcw_ref, fcb_ref, convw_ref, bias_ref, x_ref, o_ref,
                  wmod_ref, *, fc_gain, weight_gain, conv_clamp):
    b = pl.program_id(0)

    # Style path hoisted out of the spatial loop: runs once per batch row.
    # The (3, ..., C_in) layout keeps the m1/m2/m3 chunk on the leading axis,
    # so there is no non-128-aligned lane slice.
    @pl.when(pl.program_id(1) == 0)
    def _():
        wrow = w_ref[pl.ds(b, 1), :]                                    # (1, w_dim)
        m = [jnp.dot(wrow, fcw_ref[k], preferred_element_type=jnp.float32)
             * fc_gain + fcb_ref[k] for k in range(3)]                  # 3 x (1, C_in)
        styles = (m[0] * m[1] + m[2]) * weight_gain                     # (1, C_in)
        wmod_ref[...] = (convw_ref[...] * styles).astype(wmod_ref.dtype)

    # Modulated 1x1 conv over this spatial tile (lane-dense matmul) + bias.
    out = jnp.dot(wmod_ref[...], x_ref[0],
                  preferred_element_type=jnp.float32)                   # (C_out, T)
    out = out + bias_ref[...]                                           # (C_out, 1) bcast
    if conv_clamp is not None:
        out = jnp.clip(out, -conv_clamp, conv_clamp)
    o_ref[0] = out.astype(o_ref.dtype)


def _pick_tile_hw(hw, c_in, c_out, dtype_bytes, batch,
                  vmem_budget_bytes=16 << 20):
    """Pick a power-of-two spatial (lane) tile in {128, ..., 4096}.

    The budget covers the double-buffered x and out blocks (sublane-padded to
    8 rows); the style/weight/bias operands and the (C_out, C_in) scratch are
    tiny and resident.  16 MiB keeps the working set inside v7x's 32 MiB
    scoped / 64 MiB physical VMEM while >= 512-lane tiles already reach ~85%
    of HBM roofline — do NOT raise this to exploit v5e/v6e's 128 MiB VMEM.
    """
    if hw <= 128:
        return hw  # full spatial extent, single unpadded block
    pad8 = lambda c: ((c + 7) // 8) * 8
    per_col = 2 * (pad8(c_in) + pad8(c_out)) * dtype_bytes  # 2-deep x + out buffers
    hw128 = ((hw + 127) // 128) * 128
    tile = 128
    for cand in (256, 512, 1024, 2048, 4096):
        if cand <= hw128 and cand * per_col <= vmem_budget_bytes:
            tile = cand
    # v7x megacore: keep the grid at >= 2 programs when B == 1 (halve the tile
    # while it stays a legal >=128-lane block).
    if batch == 1:
        while tile > 128 and pl.cdiv(hw, tile) < 2:
            tile //= 2
    return tile


def to_rgb_forward(x, w, params, conv_clamp=None):
    """x: [B, C_in, H, W] (NCHW), w: [B, w_dim] -> [B, C_out, H, W]."""
    B, C_in, H, W = x.shape
    HW = H * W
    fc_w = params["fc_w"]          # [3*C_in, w_dim]
    fc_b = params["fc_b"]          # [3*C_in]
    conv_w = params["conv_w"]      # [C_out, C_in, 1, 1]
    bias = params["bias"]          # [C_out]
    w_dim = fc_w.shape[1]
    C_out = conv_w.shape[0]

    weight_gain = 1.0 / np.sqrt(C_in * 1 * 1)   # kernel_size == 1
    fc_gain = 1.0 / np.sqrt(w_dim)              # FullyConnectedLayers runtime gain

    # One-off parameter prep (tiny): FC weight as (3, w_dim, C_in) so the
    # StyleSplit chunk is a leading-axis index inside the kernel.
    fc_w3 = fc_w.reshape(3, C_in, w_dim).transpose(0, 2, 1).astype(jnp.float32)
    fc_b3 = fc_b.reshape(3, 1, C_in).astype(jnp.float32)
    conv_w2 = conv_w.reshape(C_out, C_in).astype(jnp.float32)
    bias2 = bias.reshape(C_out, 1).astype(jnp.float32)
    w2 = w.astype(jnp.float32)

    dtype_bytes = jnp.dtype(x.dtype).itemsize
    tile = _pick_tile_hw(HW, C_in, C_out, dtype_bytes, B)
    num_tiles = pl.cdiv(HW, tile)   # ragged last block masked by Pallas; no host pad

    x3 = x.reshape(B, C_in, HW)     # HW stays the lane (last) dim -> dense stores

    kern = functools.partial(_torgb_kernel, fc_gain=fc_gain,
                             weight_gain=weight_gain, conv_clamp=conv_clamp)

    param_bytes = 4 * (w2.size + fc_w3.size + fc_b3.size + conv_w2.size + bias2.size)
    cost = pl.CostEstimate(
        flops=2 * B * C_out * C_in * HW + 2 * B * 3 * C_in * w_dim,
        transcendentals=0,
        bytes_accessed=dtype_bytes * B * (C_in + C_out) * HW + param_bytes,
    )

    out = pl.pallas_call(
        kern,
        out_shape=jax.ShapeDtypeStruct((B, C_out, HW), x.dtype),
        grid_spec=pltpu.PrefetchScalarGridSpec(
            num_scalar_prefetch=0,
            grid=(B, num_tiles),
            in_specs=[
                pl.BlockSpec((B, w_dim), lambda b, s: (0, 0)),
                pl.BlockSpec((3, w_dim, C_in), lambda b, s: (0, 0, 0)),
                pl.BlockSpec((3, 1, C_in), lambda b, s: (0, 0, 0)),
                pl.BlockSpec((C_out, C_in), lambda b, s: (0, 0)),
                pl.BlockSpec((C_out, 1), lambda b, s: (0, 0)),
                pl.BlockSpec((1, C_in, tile), lambda b, s: (b, 0, s)),
            ],
            out_specs=pl.BlockSpec((1, C_out, tile), lambda b, s: (b, 0, s)),
            scratch_shapes=[pltpu.VMEM((C_out, C_in), x.dtype)],
        ),
        compiler_params=pltpu.CompilerParams(
            # batch axis parallel (megacore); spatial axis arbitrary so the
            # per-batch scratch init at s == 0 always precedes its other tiles.
            dimension_semantics=("parallel", "arbitrary"),
            vmem_limit_bytes=32 << 20,
        ),
        cost_estimate=cost,
    )(w2, fc_w3, fc_b3, conv_w2, bias2, x3)

    return out.reshape(B, C_out, H, W)


def to_rgb_reference(x, w, params, conv_clamp=None):
    """Pure-JAX reference (mirrors the PyTorch forward)."""
    B, C_in, H, W = x.shape
    fc_w, fc_b = params["fc_w"], params["fc_b"]
    conv_w, bias = params["conv_w"], params["bias"]
    w_dim = fc_w.shape[1]
    C_out = conv_w.shape[0]
    weight_gain = 1.0 / np.sqrt(C_in)
    fc_gain = 1.0 / np.sqrt(w_dim)

    s_full = w @ fc_w.T * fc_gain + fc_b[None, :]
    m1, m2, m3 = jnp.split(s_full, 3, axis=1)
    styles = (m1 * m2 + m3) * weight_gain                            # [B, C_in]

    w_mod = conv_w.reshape(C_out, C_in)[None] * styles[:, None, :]   # [B, C_out, C_in]
    out = jnp.einsum('boc,bchw->bohw', w_mod, x) + bias.reshape(1, -1, 1, 1)
    if conv_clamp is not None:
        out = jnp.clip(out, -conv_clamp, conv_clamp)
    return out


def _make_params(key, C_in, C_out, w_dim):
    k1, k2 = jax.random.split(key)
    return {
        # StyleSplit's FullyConnectedLayers: weight ~ N(0,1), bias_init=1
        "fc_w": jax.random.normal(k1, (3 * C_in, w_dim), jnp.float32),
        "fc_b": jnp.ones((3 * C_in,), jnp.float32),
        # ToRGBLayer.weight = 0.1 * randn([C_out, C_in, 1, 1]); bias = zeros
        "conv_w": 0.1 * jax.random.normal(k2, (C_out, C_in, 1, 1), jnp.float32),
        "bias": jnp.zeros((C_out,), jnp.float32),
    }


if __name__ == "__main__":
    key = jax.random.PRNGKey(0)
    kp, kx, kw, kp2, kx2, kw2 = jax.random.split(key, 6)

    # Small shapes consistent with ToRGBLayer: in_channels=4, out_channels=3,
    # w_dim=32, kernel_size=1, batch=2, spatial=16x16.
    B, C_in, C_out, w_dim, H, W = 2, 4, 3, 32, 16, 16
    params = _make_params(kp, C_in, C_out, w_dim)
    x = jax.random.normal(kx, (B, C_in, H, W), jnp.float32)
    w = jax.random.normal(kw, (B, w_dim), jnp.float32)

    # No clamp
    out = jax.block_until_ready(to_rgb_forward(x, w, params, conv_clamp=None))
    ref = to_rgb_reference(x, w, params, conv_clamp=None)
    np.testing.assert_allclose(np.asarray(out), np.asarray(ref), rtol=1e-5, atol=1e-5)
    assert out.shape == (B, C_out, H, W)

    # With clamp (exercises the clip path)
    out_c = jax.block_until_ready(to_rgb_forward(x, w, params, conv_clamp=0.5))
    ref_c = to_rgb_reference(x, w, params, conv_clamp=0.5)
    np.testing.assert_allclose(np.asarray(out_c), np.asarray(ref_c), rtol=1e-5, atol=1e-5)

    # B=1 with a spatial size that does not divide the tile: exercises the
    # megacore tile-halving heuristic and the pad-free ragged last block.
    B2, H2, W2 = 1, 20, 20
    params2 = _make_params(kp2, C_in, C_out, w_dim)
    x2 = jax.random.normal(kx2, (B2, C_in, H2, W2), jnp.float32)
    w2 = jax.random.normal(kw2, (B2, w_dim), jnp.float32)
    out2 = jax.block_until_ready(to_rgb_forward(x2, w2, params2, conv_clamp=None))
    ref2 = to_rgb_reference(x2, w2, params2, conv_clamp=None)
    np.testing.assert_allclose(np.asarray(out2), np.asarray(ref2), rtol=1e-5, atol=1e-5)

    print("KERNEL_OK")
</pallas_src>

<mosaic_0001>
module attributes {stable_mosaic.version = 11 : i64} {
  func.func @_torgb_kernel(%arg0: i32, %arg1: i32, %arg2: memref<2x32xf32, #tpu.memory_space<vmem>>, %arg3: memref<3x32x4xf32, #tpu.memory_space<vmem>>, %arg4: memref<3x1x4xf32, #tpu.memory_space<vmem>>, %arg5: memref<3x4xf32, #tpu.memory_space<vmem>>, %arg6: memref<3x1xf32, #tpu.memory_space<vmem>>, %arg7: memref<1x4x256xf32, #tpu.memory_space<vmem>>, %arg8: memref<1x3x256xf32, #tpu.memory_space<vmem>>, %arg9: memref<3x4xf32, #tpu.memory_space<vmem>>) attributes {dimension_semantics = [#tpu.dimension_semantics<parallel>, #tpu.dimension_semantics<arbitrary>], iteration_bounds = array<i64: 2, 1>, scalar_prefetch = 0 : i64, scratch_operands = 1 : i64, tpu.core_type = #tpu.core_type<tc>, window_params = [{pipeline_mode = #tpu.pipeline_mode<synchronous>, transform_indices = @transform_0, window_bounds = array<i64: 2, 32>}, {pipeline_mode = #tpu.pipeline_mode<synchronous>, transform_indices = @transform_1, window_bounds = array<i64: 3, 32, 4>}, {pipeline_mode = #tpu.pipeline_mode<synchronous>, transform_indices = @transform_2, window_bounds = array<i64: 3, 1, 4>}, {pipeline_mode = #tpu.pipeline_mode<synchronous>, transform_indices = @transform_3, window_bounds = array<i64: 3, 4>}, {pipeline_mode = #tpu.pipeline_mode<synchronous>, transform_indices = @transform_4, window_bounds = array<i64: 3, 1>}, {transform_indices = @transform_5, window_bounds = array<i64: 1, 4, 256>}, {transform_indices = @transform_6, window_bounds = array<i64: 1, 3, 256>}]} {
    %c0_i32 = arith.constant 0 : i32
    %0 = arith.cmpi eq, %arg1, %c0_i32 : i32
    %1 = arith.extui %0 : i1 to i32
    %c0_i32_0 = arith.constant 0 : i32
    %2 = arith.cmpi ne, %1, %c0_i32_0 : i32
    scf.if %2 {
      %13 = arith.index_cast %arg0 : i32 to index
      %c0_10 = arith.constant 0 : index
      %14 = vector.load %arg2[%13, %c0_10] : memref<2x32xf32, #tpu.memory_space<vmem>>, vector<1x32xf32>
      %c0_11 = arith.constant 0 : index
      %c0_12 = arith.constant 0 : index
      %c0_13 = arith.constant 0 : index
      %15 = vector.load %arg3[%c0_11, %c0_12, %c0_13] : memref<3x32x4xf32, #tpu.memory_space<vmem>>, vector<1x32x4xf32>
      %16 = vector.shape_cast %15 : vector<1x32x4xf32> to vector<32x4xf32>
      %cst_14 = arith.constant dense<0.000000e+00> : vector<1x4xf32>
      %17 = tpu.matmul %14, %16, %cst_14 {dimension_numbers = #tpu.dot_dimension_numbers<[1], [0], [0], [1], [0, 0, 1, 1], [], []>} : vector<1x32xf32>, vector<32x4xf32>, vector<1x4xf32> -> vector<1x4xf32>
      %cst_15 = arith.constant 0.176776692 : f32
      %18 = vector.broadcast %cst_15 : f32 to vector<1x4xf32>
      %19 = arith.mulf %17, %18 : vector<1x4xf32>
      %c0_16 = arith.constant 0 : index
      %c0_17 = arith.constant 0 : index
      %c0_18 = arith.constant 0 : index
      %20 = vector.load %arg4[%c0_16, %c0_17, %c0_18] : memref<3x1x4xf32, #tpu.memory_space<vmem>>, vector<1x1x4xf32>
      %21 = vector.shape_cast %20 : vector<1x1x4xf32> to vector<1x4xf32>
      %22 = arith.addf %19, %21 : vector<1x4xf32>
      %c1 = arith.constant 1 : index
      %c0_19 = arith.constant 0 : index
      %c0_20 = arith.constant 0 : index
      %23 = vector.load %arg3[%c1, %c0_19, %c0_20] : memref<3x32x4xf32, #tpu.memory_space<vmem>>, vector<1x32x4xf32>
      %24 = vector.shape_cast %23 : vector<1x32x4xf32> to vector<32x4xf32>
      %cst_21 = arith.constant dense<0.000000e+00> : vector<1x4xf32>
      %25 = tpu.matmul %14, %24, %cst_21 {dimension_numbers = #tpu.dot_dimension_numbers<[1], [0], [0], [1], [0, 0, 1, 1], [], []>} : vector<1x32xf32>, vector<32x4xf32>, vector<1x4xf32> -> vector<1x4xf32>
      %cst_22 = arith.constant 0.176776692 : f32
      %26 = vector.broadcast %cst_22 : f32 to vector<1x4xf32>
      %27 = arith.mulf %25, %26 : vector<1x4xf32>
      %c1_23 = arith.constant 1 : index
      %c0_24 = arith.constant 0 : index
      %c0_25 = arith.constant 0 : index
      %28 = vector.load %arg4[%c1_23, %c0_24, %c0_25] : memref<3x1x4xf32, #tpu.memory_space<vmem>>, vector<1x1x4xf32>
      %29 = vector.shape_cast %28 : vector<1x1x4xf32> to vector<1x4xf32>
      %30 = arith.addf %27, %29 : vector<1x4xf32>
      %c2 = arith.constant 2 : index
      %c0_26 = arith.constant 0 : index
      %c0_27 = arith.constant 0 : index
      %31 = vector.load %arg3[%c2, %c0_26, %c0_27] : memref<3x32x4xf32, #tpu.memory_space<vmem>>, vector<1x32x4xf32>
      %32 = vector.shape_cast %31 : vector<1x32x4xf32> to vector<32x4xf32>
      %cst_28 = arith.constant dense<0.000000e+00> : vector<1x4xf32>
      %33 = tpu.matmul %14, %32, %cst_28 {dimension_numbers = #tpu.dot_dimension_numbers<[1], [0], [0], [1], [0, 0, 1, 1], [], []>} : vector<1x32xf32>, vector<32x4xf32>, vector<1x4xf32> -> vector<1x4xf32>
      %cst_29 = arith.constant 0.176776692 : f32
      %34 = vector.broadcast %cst_29 : f32 to vector<1x4xf32>
      %35 = arith.mulf %33, %34 : vector<1x4xf32>
      %c2_30 = arith.constant 2 : index
      %c0_31 = arith.constant 0 : index
      %c0_32 = arith.constant 0 : index
      %36 = vector.load %arg4[%c2_30, %c0_31, %c0_32] : memref<3x1x4xf32, #tpu.memory_space<vmem>>, vector<1x1x4xf32>
      %37 = vector.shape_cast %36 : vector<1x1x4xf32> to vector<1x4xf32>
      %38 = arith.addf %35, %37 : vector<1x4xf32>
      %39 = arith.mulf %22, %30 : vector<1x4xf32>
      %40 = arith.addf %39, %38 : vector<1x4xf32>
      %cst_33 = arith.constant 5.000000e-01 : f32
      %41 = vector.broadcast %cst_33 : f32 to vector<1x4xf32>
      %42 = arith.mulf %40, %41 : vector<1x4xf32>
      %c0_34 = arith.constant 0 : index
      %c0_35 = arith.constant 0 : index
      %43 = vector.load %arg5[%c0_34, %c0_35] : memref<3x4xf32, #tpu.memory_space<vmem>>, vector<3x4xf32>
      %44 = vector.broadcast %42 : vector<1x4xf32> to vector<3x4xf32>
      %45 = arith.mulf %43, %44 : vector<3x4xf32>
      %c0_36 = arith.constant 0 : index
      %c0_37 = arith.constant 0 : index
      %46 = vector.load %arg9[%c0_36, %c0_37] : memref<3x4xf32, #tpu.memory_space<vmem>>, vector<3x4xf32>
      tpu.vector_store %arg9[%c0_36, %c0_37], %45 {strides = array<i32>} : memref<3x4xf32, #tpu.memory_space<vmem>>, vector<3x4xf32>,
    } else {
    }
    %c0 = arith.constant 0 : index
    %c0_1 = arith.constant 0 : index
    %3 = vector.load %arg9[%c0, %c0_1] : memref<3x4xf32, #tpu.memory_space<vmem>>, vector<3x4xf32>
    %c0_2 = arith.constant 0 : index
    %c0_3 = arith.constant 0 : index
    %c0_4 = arith.constant 0 : index
    %4 = vector.load %arg7[%c0_2, %c0_3, %c0_4] : memref<1x4x256xf32, #tpu.memory_space<vmem>>, vector<1x4x256xf32>
    %5 = vector.shape_cast %4 : vector<1x4x256xf32> to vector<4x256xf32>
    %cst = arith.constant dense<0.000000e+00> : vector<3x256xf32>
    %6 = tpu.matmul %3, %5, %cst {dimension_numbers = #tpu.dot_dimension_numbers<[1], [0], [0], [1], [0, 0, 1, 1], [], []>} : vector<3x4xf32>, vector<4x256xf32>, vector<3x256xf32> -> vector<3x256xf32>
    %c0_5 = arith.constant 0 : index
    %c0_6 = arith.constant 0 : index
    %7 = vector.load %arg6[%c0_5, %c0_6] : memref<3x1xf32, #tpu.memory_space<vmem>>, vector<3x1xf32>
    %8 = vector.broadcast %7 : vector<3x1xf32> to vector<3x256xf32>
    %9 = arith.addf %6, %8 : vector<3x256xf32>
    %c0_7 = arith.constant 0 : index
    %c0_8 = arith.constant 0 : index
    %c0_9 = arith.constant 0 : index
    %10 = vector.load %arg8[%c0_7, %c0_8, %c0_9] : memref<1x3x256xf32, #tpu.memory_space<vmem>>, vector<1x3x256xf32>
    %11 = vector.shape_cast %10 : vector<1x3x256xf32> to vector<3x256xf32>
    %12 = vector.shape_cast %9 : vector<3x256xf32> to vector<1x3x256xf32>
    tpu.vector_store %arg8[%c0_7, %c0_8, %c0_9], %12 {strides = array<i32>} : memref<1x3x256xf32, #tpu.memory_space<vmem>>, vector<1x3x256xf32>,
    return
  }
  func.func @transform_0(%arg0: i32, %arg1: i32) -> (i32, i32) {
    %c0_i32 = arith.constant 0 : i32
    %c0_i32_0 = arith.constant 0 : i32
    %c0_i32_1 = arith.constant 0 : i32
    return %c0_i32, %c0_i32_0 : i32, i32
  }
  func.func @transform_1(%arg0: i32, %arg1: i32) -> (i32, i32, i32) {
    %c0_i32 = arith.constant 0 : i32
    %c0_i32_0 = arith.constant 0 : i32
    %c0_i32_1 = arith.constant 0 : i32
    %c0_i32_2 = arith.constant 0 : i32
    return %c0_i32, %c0_i32_0, %c0_i32_1 : i32, i32, i32
  }
  func.func @transform_2(%arg0: i32, %arg1: i32) -> (i32, i32, i32) {
    %c0_i32 = arith.constant 0 : i32
    %c0_i32_0 = arith.constant 0 : i32
    %c0_i32_1 = arith.constant 0 : i32
    %c0_i32_2 = arith.constant 0 : i32
    return %c0_i32, %c0_i32_0, %c0_i32_1 : i32, i32, i32
  }
  func.func @transform_3(%arg0: i32, %arg1: i32) -> (i32, i32) {
    %c0_i32 = arith.constant 0 : i32
    %c0_i32_0 = arith.constant 0 : i32
    %c0_i32_1 = arith.constant 0 : i32
    return %c0_i32, %c0_i32_0 : i32, i32
  }
  func.func @transform_4(%arg0: i32, %arg1: i32) -> (i32, i32) {
    %c0_i32 = arith.constant 0 : i32
    %c0_i32_0 = arith.constant 0 : i32
    %c0_i32_1 = arith.constant 0 : i32
    return %c0_i32, %c0_i32_0 : i32, i32
  }
  func.func @transform_5(%arg0: i32, %arg1: i32) -> (i32, i32, i32) {
    %c0_i32 = arith.constant 0 : i32
    %c0_i32_0 = arith.constant 0 : i32
    return %arg0, %c0_i32, %arg1 : i32, i32, i32
  }
  func.func @transform_6(%arg0: i32, %arg1: i32) -> (i32, i32, i32) {
    %c0_i32 = arith.constant 0 : i32
    %c0_i32_0 = arith.constant 0 : i32
    return %arg0, %c0_i32, %arg1 : i32, i32, i32
  }
}

</mosaic_0001>

<llo_original>
// kernel: tpu_custom_call.1
$region0: #{tpu_custom_call.1}
  #allocation0 [shape = 'u32[]', space=smem, size = 0x4, offset = 0x4, fixed_abs, tag = 'smem constant byte address 0x4 - core index']
  #allocation1 [shape = 'u32[144,128]{1,0:T(1,128)}', space=vmem, size = 0x12000, scoped, tag = 'internal scratch']
  #allocation2 [shape = 'f32[3,4]{1,0:T(4,128)}', space=vmem, size = 0x800, scoped, tag = 'scratch operand']
  %s0 = inlined_call_operand.vmem [shape: f32[2,32], index: 0, kind: input, shape index: {}]
  %s1 = inlined_call_operand.vmem [shape: f32[3,32,4], index: 1, kind: input, shape index: {}]
  %s2 = inlined_call_operand.vmem [shape: f32[3,1,4], index: 2, kind: input, shape index: {}]
  %s3 = inlined_call_operand.vmem [shape: f32[3,4], index: 3, kind: input, shape index: {}]
  %s4 = inlined_call_operand.vmem [shape: f32[3,1], index: 4, kind: input, shape index: {}]
  %s5 = inlined_call_operand.vmem [shape: f32[2,4,256], index: 5, kind: input, shape index: {}]
  %s6 = inlined_call_operand.vmem [shape: f32[2,3,256], index: 6, kind: output, shape index: {}]
  %s7 = sld [smem:[#allocation0]]
  $region61: #{tpu_custom_call.1} parent=0
    _
  %s9 = ssub.s32 1, %s7
  %s10 = scalar_select 0, %s9, %s7
  loop: start=0, step=1, limit=4
  $region2: #{tpu_custom_call.1} parent=0 // loop_pre_header
    _
  $region3: #{tpu_custom_call.1} parent=0 // loop_header
    %s12 = sphi 0, %s16
    %p13 = scmp.ge.s32.totalorder %s12, 4
    %s19 = sphi 0, %s31
    %s20 = sphi 0, %s27
    %s21 = sphi 0, %s19
    %s22 = sphi 0, %s20
    %s23 = sphi 0, %s21
    %s24 = sphi 0, %s22
    %s32 = sphi 0, %s32
    %s34 = sphi 0, %s32
    %s35 = sphi 0, %s34
    %s49 = sphi 0, %s35
    %s53 = sphi 0, %s53
    %s55 = sphi 0, %s53
    %s56 = sphi 0, %s55
    %s70 = sphi 0, %s56
    %s74 = sphi 0, %s74
    %s76 = sphi 0, %s74
    %s77 = sphi 0, %s76
    %s91 = sphi 0, %s77
    %s95 = sphi 0, %s95
    %s97 = sphi 0, %s95
    %s98 = sphi 0, %s97
    %s112 = sphi 0, %s98
    %s116 = sphi 0, %s116
    %s118 = sphi 0, %s116
    %s119 = sphi 0, %s118
    %s133 = sphi 0, %s119
    %s141 = sphi 0, %s143
    %s144 = sphi 0, %s141
    %s145 = sphi 0, %s144
    %s161 = sphi 0, %s145
    %s169 = sphi 0, %s171
    %s172 = sphi 0, %s169
    %s173 = sphi 0, %s172
    %s189 = sphi 0, %s173
  $region4: #{tpu_custom_call.1} parent=0 // loop_header_branch
    %15 = sbr.rel (%p13) target = $region8
  $region5: #{tpu_custom_call.1} parent=0 // loop_body
    %s17 = ssub.s32 %s12, 1
    %s18 = ssub.s32 %s12, 2
    %s25 = sadd.s32 1, %s20
    %p26 = scmp.ge.s32.totalorder %s25, 1
    %s27 = scalar_select %p26, 0, %s25
    %s28 = sadd.s32 1, %s19
    %s29 = scalar_select %p26, %s28, %s19
    %p30 = scmp.ge.s32.totalorder %s29, 2
    %s31 = scalar_select %p30, 0, %s29
    %s33 = sadd.s32 %s32, 1
    %p36 = scmp.eq.s32.totalorder %s12, 1
    %p37 = scmp.ne.s32.totalorder %s32, %s34
    %p38 = scmp.eq.s32.totalorder %s12, 0
    %p39 = por %p37, %p38
    %p40 = scmp.ne.s32.totalorder %s32, %s34
    %p41 = scmp.eq.s32.totalorder %s17, 1
    %p42 = por %p40, %p41
    %p43 = scmp.ne.s32.totalorder %s34, %s35
    %p44 = scmp.eq.s32.totalorder %s17, 0
    %p45 = por %p43, %p44
    %p46 = scmp.ne.s32.totalorder %s34, %s35
    %p47 = scmp.eq.s32.totalorder %s18, 1
    %p48 = por %p46, %p47
    %p50 = scmp.ne.s32.totalorder %s35, %s49
    %p51 = scmp.eq.s32.totalorder %s18, 0
    %p52 = por %p50, %p51
    %s54 = sadd.s32 %s53, 1
    %p57 = scmp.eq.s32.totalorder %s12, 1
    %p58 = scmp.ne.s32.totalorder %s53, %s55
    %p59 = scmp.eq.s32.totalorder %s12, 0
    %p60 = por %p58, %p59
    %p61 = scmp.ne.s32.totalorder %s53, %s55
    %p62 = scmp.eq.s32.totalorder %s17, 1
    %p63 = por %p61, %p62
    %p64 = scmp.ne.s32.totalorder %s55, %s56
    %p65 = scmp.eq.s32.totalorder %s17, 0
    %p66 = por %p64, %p65
    %p67 = scmp.ne.s32.totalorder %s55, %s56
    %p68 = scmp.eq.s32.totalorder %s18, 1
    %p69 = por %p67, %p68
    %p71 = scmp.ne.s32.totalorder %s56, %s70
    %p72 = scmp.eq.s32.totalorder %s18, 0
    %p73 = por %p71, %p72
    %s75 = sadd.s32 %s74, 1
    %p78 = scmp.eq.s32.totalorder %s12, 1
    %p79 = scmp.ne.s32.totalorder %s74, %s76
    %p80 = scmp.eq.s32.totalorder %s12, 0
    %p81 = por %p79, %p80
    %p82 = scmp.ne.s32.totalorder %s74, %s76
    %p83 = scmp.eq.s32.totalorder %s17, 1
    %p84 = por %p82, %p83
    %p85 = scmp.ne.s32.totalorder %s76, %s77
    %p86 = scmp.eq.s32.totalorder %s17, 0
    %p87 = por %p85, %p86
    %p88 = scmp.ne.s32.totalorder %s76, %s77
    %p89 = scmp.eq.s32.totalorder %s18, 1
    %p90 = por %p88, %p89
    %p92 = scmp.ne.s32.totalorder %s77, %s91
    %p93 = scmp.eq.s32.totalorder %s18, 0
    %p94 = por %p92, %p93
    %s96 = sadd.s32 %s95, 1
    %p99 = scmp.eq.s32.totalorder %s12, 1
    %p100 = scmp.ne.s32.totalorder %s95, %s97
    %p101 = scmp.eq.s32.totalorder %s12, 0
    %p102 = por %p100, %p101
    %p103 = scmp.ne.s32.totalorder %s95, %s97
    %p104 = scmp.eq.s32.totalorder %s17, 1
    %p105 = por %p103, %p104
    %p106 = scmp.ne.s32.totalorder %s97, %s98
    %p107 = scmp.eq.s32.totalorder %s17, 0
    %p108 = por %p106, %p107
    %p109 = scmp.ne.s32.totalorder %s97, %s98
    %p110 = scmp.eq.s32.totalorder %s18, 1
    %p111 = por %p109, %p110
    %p113 = scmp.ne.s32.totalorder %s98, %s112
    %p114 = scmp.eq.s32.totalorder %s18, 0
    %p115 = por %p113, %p114
    %s117 = sadd.s32 %s116, 1
    %p120 = scmp.eq.s32.totalorder %s12, 1
    %p121 = scmp.ne.s32.totalorder %s116, %s118
    %p122 = scmp.eq.s32.totalorder %s12, 0
    %p123 = por %p121, %p122
    %p124 = scmp.ne.s32.totalorder %s116, %s118
    %p125 = scmp.eq.s32.totalorder %s17, 1
    %p126 = por %p124, %p125
    %p127 = scmp.ne.s32.totalorder %s118, %s119
    %p128 = scmp.eq.s32.totalorder %s17, 0
    %p129 = por %p127, %p128
    %p130 = scmp.ne.s32.totalorder %s118, %s119
    %p131 = scmp.eq.s32.totalorder %s18, 1
    %p132 = por %p130, %p131
    %p134 = scmp.ne.s32.totalorder %s119, %s133
    %p135 = scmp.eq.s32.totalorder %s18, 0
    %p136 = por %p134, %p135
    %s137 = ssub.s32 %s19, %s31
    %s138 = ssub.s32 %s20, %s27
    %s139 = sor.u32 %s137, %s138
    %p140 = scmp.eq.s32.totalorder %s139, 0
    %s142 = sadd.s32 %s141, 1
    %s143 = scalar_select %p140, %s141, %s142
    %p146 = pneg %p140
    %p147 = scmp.eq.s32.totalorder %s12, 1
    %p148 = por %p146, %p147
    %p149 = scmp.ne.s32.totalorder %s141, %s144
    %p150 = scmp.eq.s32.totalorder %s12, 0
    %p151 = por %p149, %p150
    %p152 = scmp.ne.s32.totalorder %s141, %s144
    %p153 = scmp.eq.s32.totalorder %s17, 1
    %p154 = por %p152, %p153
    %p155 = scmp.ne.s32.totalorder %s144, %s145
    %p156 = scmp.eq.s32.totalorder %s17, 0
    %p157 = por %p155, %p156
    %p158 = scmp.ne.s32.totalorder %s144, %s145
    %p159 = scmp.eq.s32.totalorder %s18, 1
    %p160 = por %p158, %p159
    %p162 = scmp.ne.s32.totalorder %s145, %s161
    %p163 = scmp.eq.s32.totalorder %s18, 0
    %p164 = por %p162, %p163
    %s165 = ssub.s32 %s19, %s31
    %s166 = ssub.s32 %s20, %s27
    %s167 = sor.u32 %s165, %s166
    %p168 = scmp.eq.s32.totalorder %s167, 0
    %s170 = sadd.s32 %s169, 1
    %s171 = scalar_select %p168, %s169, %s170
    %p174 = pneg %p168
    %p175 = scmp.eq.s32.totalorder %s12, 1
    %p176 = por %p174, %p175
    %p177 = scmp.ne.s32.totalorder %s169, %s172
    %p178 = scmp.eq.s32.totalorder %s12, 0
    %p179 = por %p177, %p178
    %p180 = scmp.ne.s32.totalorder %s169, %s172
    %p181 = scmp.eq.s32.totalorder %s17, 1
    %p182 = por %p180, %p181
    %p183 = scmp.ne.s32.totalorder %s172, %s173
    %p184 = scmp.eq.s32.totalorder %s17, 0
    %p185 = por %p183, %p184
    %p186 = scmp.ne.s32.totalorder %s172, %s173
    %p187 = scmp.eq.s32.totalorder %s18, 1
    %p188 = por %p186, %p187
    %p190 = scmp.ne.s32.totalorder %s173, %s189
    %p191 = scmp.eq.s32.totalorder %s18, 0
    %p192 = por %p190, %p191
    %p193 = scmp.le.s32.totalorder 1, %s12
    %p194 = scmp.lt.s32.totalorder %s12, 3
    %p195 = pnand %p193, %p194
    %p196 = pneg %p195
    // Predicated region
    $region9: #{tpu_custom_call.1} parent=5 // pred_check
      _
    $region10: #{tpu_custom_call.1} parent=5 // pred_check_branch
      %198 = sbr.rel (%p195) target = $region12
    $region11: #{tpu_custom_call.1} parent=5 // pred_region
      %s199 = ssub.s32 %s12, 1
      // Predicated region
      $region13: #{tpu_custom_call.1} parent=11 // pred_check
        %p200 = pneg %p45
      $region14: #{tpu_custom_call.1} parent=11 // pred_check_branch
        %202 = sbr.rel (%p200) target = $region16
      $region15: #{tpu_custom_call.1} parent=11 // pred_region
        _
      $region16: #{tpu_custom_call.1} parent=11 // pred_fallthru
        _
      // Predicated region
      $region17: #{tpu_custom_call.1} parent=11 // pred_check
        %p203 = pneg %p66
      $region18: #{tpu_custom_call.1} parent=11 // pred_check_branch
        %205 = sbr.rel (%p203) target = $region20
      $region19: #{tpu_custom_call.1} parent=11 // pred_region
        _
      $region20: #{tpu_custom_call.1} parent=11 // pred_fallthru
        _
      // Predicated region
      $region21: #{tpu_custom_call.1} parent=11 // pred_check
        %p206 = pneg %p87
      $region22: #{tpu_custom_call.1} parent=11 // pred_check_branch
        %208 = sbr.rel (%p206) target = $region24
      $region23: #{tpu_custom_call.1} parent=11 // pred_region
        _
      $region24: #{tpu_custom_call.1} parent=11 // pred_fallthru
        _
      // Predicated region
      $region25: #{tpu_custom_call.1} parent=11 // pred_check
        %p209 = pneg %p108
      $region26: #{tpu_custom_call.1} parent=11 // pred_check_branch
        %211 = sbr.rel (%p209) target = $region28
      $region27: #{tpu_custom_call.1} parent=11 // pred_region
        _
      $region28: #{tpu_custom_call.1} parent=11 // pred_fallthru
        _
      // Predicated region
      $region29: #{tpu_custom_call.1} parent=11 // pred_check
        %p212 = pneg %p129
      $region30: #{tpu_custom_call.1} parent=11 // pred_check_branch
        %214 = sbr.rel (%p212) target = $region32
      $region31: #{tpu_custom_call.1} parent=11 // pred_region
        _
      $region32: #{tpu_custom_call.1} parent=11 // pred_fallthru
        _
    $region12: #{tpu_custom_call.1} parent=5 // pred_fallthru
      _
    %p215 = scmp.lt.s32.totalorder %s12, 2
    // Predicated region
    $region33: #{tpu_custom_call.1} parent=5 // pred_check
      %p216 = pneg %p215
    $region34: #{tpu_custom_call.1} parent=5 // pred_check_branch
      %218 = sbr.rel (%p216) target = $region36
    $region35: #{tpu_custom_call.1} parent=5 // pred_region
      // Predicated region
      $region37: #{tpu_custom_call.1} parent=35 // pred_check
        %p219 = pneg %p151
      $region38: #{tpu_custom_call.1} parent=35 // pred_check_branch
        %221 = sbr.rel (%p219) target = $region40
      $region39: #{tpu_custom_call.1} parent=35 // pred_region
        %s222 = smul.u32 2, %s20
        %p223 = scmp.lt.s32.totalorder %s19, 1
        %s224 = scalar_select %p223, %s19, 1
        %p225 = scmp.lt.s32.totalorder %s222, 1
        %s226 = scalar_select %p225, %s222, 1
        %s227 = smul.addr %s224, 2
        %s228 = sadd.s32 %s226, %s227
        %s229 = smul.addr %s228, 4
        %s230 = scalar_lea.vmem %s5, %s229
        %s231 = smul.u32 2, %s20
      $region40: #{tpu_custom_call.1} parent=35 // pred_fallthru
        _
    $region36: #{tpu_custom_call.1} parent=5 // pred_fallthru
      _
    %p232 = scmp.le.s32.totalorder 1, %s12
    %p233 = scmp.lt.s32.totalorder %s12, 3
    %p234 = pnand %p232, %p233
    %p235 = pneg %p234
    // Predicated region
    $region41: #{tpu_custom_call.1} parent=5 // pred_check
      _
    $region42: #{tpu_custom_call.1} parent=5 // pred_check_branch
      %237 = sbr.rel (%p234) target = $region44
    $region43: #{tpu_custom_call.1} parent=5 // pred_region
      %s238 = ssub.s32 %s12, 1
      %p239 = pneg %p45
      %p240 = pneg %p42
      %p241 = pneg %p66
      %p242 = pneg %p63
      %p243 = pneg %p87
      %p244 = pneg %p84
      %p245 = pneg %p108
      %p246 = pneg %p105
      %p247 = pneg %p129
      %p248 = pneg %p126
      %s249 = smul.u32 2, %s22
      %p250 = scmp.lt.s32.totalorder %s21, 1
      %s251 = scalar_select %p250, %s21, 1
      %p252 = scmp.lt.s32.totalorder %s249, 1
      %s253 = scalar_select %p252, %s249, 1
      %s254 = smul.addr %s251, 2
      %s255 = sadd.s32 %s253, %s254
      %s256 = smul.addr %s255, 4
      %s257 = scalar_lea.vmem %s5, %s256
      %p258 = pneg %p157
      %p259 = pneg %p154
      %p260 = pneg %p185
      %p261 = pneg %p182
      %s262 = smul.u32 2, %s22
      %p263 = scmp.lt.s32.totalorder %s21, 1
      %s264 = scalar_select %p263, %s21, 1
      %p265 = scmp.lt.s32.totalorder %s262, 1
      %s266 = scalar_select %p265, %s262, 1
      %s267 = smul.addr %s264, 2
      %s268 = sadd.s32 %s266, %s267
      %s269 = smul.addr %s268, 4
      %s270 = scalar_lea.vmem %s6, %s269
      %s271 = smul.u32 2, %s22
      %p272 = scmp.lt.s32.totalorder %s21, 1
      %s273 = scalar_select %p272, %s21, 1
      %p274 = scmp.lt.s32.totalorder %s271, 1
      %s275 = scalar_select %p274, %s271, 1
      %s276 = smul.addr %s273, 2
      %s277 = sadd.s32 %s275, %s276
      %s278 = smul.addr %s277, 4
      %s279 = scalar_lea.vmem %s5, %s278
      %s280 = smul.u32 2, %s22
      %s281 = smul.u32 2, %s22
      %p282 = scmp.lt.s32.totalorder %s21, 1
      %s283 = scalar_select %p282, %s21, 1
      %p284 = scmp.lt.s32.totalorder %s281, 1
      %s285 = scalar_select %p284, %s281, 1
      %s286 = smul.addr %s283, 2
      %s287 = sadd.s32 %s285, %s286
      %s288 = smul.addr %s287, 4
      %s289 = scalar_lea.vmem %s6, %s288
      %s290 = smul.u32 2, %s22
      %p291 = scmp.eq.s32.totalorder %s22, 0
      // Predicated region
      $region45: #{tpu_custom_call.1} parent=43 // pred_check
        %p292 = pneg %p291
      $region46: #{tpu_custom_call.1} parent=43 // pred_check_branch
        %294 = sbr.rel (%p292) target = $region48
      $region47: #{tpu_custom_call.1} parent=43 // pred_region
        %s295 = scalar_lea.vmem %s0, %s21
        %v296 = vld [vmem:[%s295] sm:$0x1]
        %v297 = vld [vmem:[%s1] sm:$0xff]
        %v298 = vld [vmem:[%s1 + $0x8] sm:$0xff]
        %v299 = vld [vmem:[%s1 + $0x10] sm:$0xff]
        %v300 = vld [vmem:[%s1 + $0x18] sm:$0xff]
        %vm301 = vcmask 261120
        %v303 = vsel %vm301, %v296, 0
        %305 = vmatprep.subr.mxu0 0.0
        %306 = vmatpush1.msra.mxu0 0.0
        %307 = vmatprep.subr.mxu0 0.0
        %308 = vmatpush1.msra.mxu0 0.0
        %309 = vmatprep.subr.mxu0 0.0
        %310 = vmatpush1.msra.mxu0 0.0
        %311 = vmatprep.subr.mxu0 0.0
        %312 = vmatpush1.msra.mxu0 0.0
        %313 = vmatprep.subr.mxu0 0.0
        %314 = vmatpush1.msra.mxu0 0.0
        %315 = vmatprep.subr.mxu0 0.0
        %316 = vmatpush1.msra.mxu0 0.0
        %317 = vmatprep.subr.mxu0 0.0
        %318 = vmatpush1.msra.mxu0 0.0
        %319 = vmatprep.subr.mxu0 0.0
        %320 = vmatpush1.msra.mxu0 0.0
        %321 = vmatprep.subr.mxu0 0.0
        %322 = vmatpush1.msra.mxu0 0.0
        %323 = vmatprep.subr.mxu0 0.0
        %324 = vmatpush1.msra.mxu0 0.0
        %325 = vmatprep.subr.mxu0 0.0
        %326 = vmatpush1.msra.mxu0 0.0
        %327 = vmatprep.subr.mxu0 0.0
        %328 = vmatpush1.msra.mxu0 0.0
        %329 = vmatprep.subr.mxu0 0.0
        %330 = vmatpush1.msra.mxu0 %v300
        %331 = vmatprep.subr.mxu0 0.0
        %332 = vmatpush1.msra.mxu0 %v299
        %333 = vmatprep.subr.mxu0 0.0
        %334 = vmatpush1.msra.mxu0 %v298
        %335 = vmatprep.subr.mxu0 0.0
        %336 = vmatpush1.msra.mxu0 %v297
        %337 = vmatprep.subr.mxu0 0.0
        %338 = vmatpush2.msra.mxu0 0.0
        %339 = vmatprep.subr.mxu0 0.0
        %340 = vmatpush2.msra.mxu0 0.0
        %341 = vmatprep.subr.mxu0 0.0
        %342 = vmatpush2.msra.mxu0 0.0
        %343 = vmatprep.subr.mxu0 0.0
        %344 = vmatpush2.msra.mxu0 0.0
        %345 = vmatprep.subr.mxu0 0.0
        %346 = vmatpush2.msra.mxu0 0.0
        %347 = vmatprep.subr.mxu0 0.0
        %348 = vmatpush2.msra.mxu0 0.0
        %349 = vmatprep.subr.mxu0 0.0
        %350 = vmatpush2.msra.mxu0 0.0
        %351 = vmatprep.subr.mxu0 0.0
        %352 = vmatpush2.msra.mxu0 0.0
        %353 = vmatprep.subr.mxu0 0.0
        %354 = vmatpush2.msra.mxu0 0.0
        %355 = vmatprep.subr.mxu0 0.0
        %356 = vmatpush2.msra.mxu0 0.0
        %357 = vmatprep.subr.mxu0 0.0
        %358 = vmatpush2.msra.mxu0 0.0
        %359 = vmatprep.subr.mxu0 0.0
        %360 = vmatpush2.msra.mxu0 0.0
        %361 = vmatprep.subr.mxu0 0.0
        %362 = vmatpush2.msra.mxu0 0.0
        %363 = vmatprep.subr.mxu0 0.0
        %364 = vmatpush2.msra.mxu0 0.0
        %365 = vmatprep.subr.mxu0 0.0
        %366 = vmatpush2.msra.mxu0 0.0
        %367 = vmatprep.subr.mxu0 0.0
        %368 = vmatpush2.msra.mxu0 0.0
        %369 = vmatprep.mubr.f32.mxu0 0.0
        %370 = vmatmul.mubr.f32.gmra.mxu0 %v303
        %v371 = vpop.f32.mrf.mxu0
        %v372 = vadd.f32 0.0, %v371
        %v373 = vpop.f32.mrf.mxu0
        %374 = vdwg.mxu0
        %v375 = vmul.f32 %v372, 0.17677669
        %v376 = vld [vmem:[%s2] sm:$0x1]
        %v377 = vadd.f32 %v375, %v376
        %s378 = scalar_lea.vmem %s1, 32
        %v379 = vld [vmem:[%s378] sm:$0xff]
        %v380 = vld [vmem:[%s378 + $0x8] sm:$0xff]
        %v381 = vld [vmem:[%s378 + $0x10] sm:$0xff]
        %v382 = vld [vmem:[%s378 + $0x18] sm:$0xff]
        %383 = vmatprep.subr.mxu0 0.0
        %384 = vmatpush1.msra.mxu0 0.0
        %385 = vmatprep.subr.mxu0 0.0
        %386 = vmatpush1.msra.mxu0 0.0
        %387 = vmatprep.subr.mxu0 0.0
        %388 = vmatpush1.msra.mxu0 0.0
        %389 = vmatprep.subr.mxu0 0.0
        %390 = vmatpush1.msra.mxu0 0.0
        %391 = vmatprep.subr.mxu0 0.0
        %392 = vmatpush1.msra.mxu0 0.0
        %393 = vmatprep.subr.mxu0 0.0
        %394 = vmatpush1.msra.mxu0 0.0
        %395 = vmatprep.subr.mxu0 0.0
        %396 = vmatpush1.msra.mxu0 0.0
        %397 = vmatprep.subr.mxu0 0.0
        %398 = vmatpush1.msra.mxu0 0.0
        %399 = vmatprep.subr.mxu0 0.0
        %400 = vmatpush1.msra.mxu0 0.0
        %401 = vmatprep.subr.mxu0 0.0
        %402 = vmatpush1.msra.mxu0 0.0
        %403 = vmatprep.subr.mxu0 0.0
        %404 = vmatpush1.msra.mxu0 0.0
        %405 = vmatprep.subr.mxu0 0.0
        %406 = vmatpush1.msra.mxu0 0.0
        %407 = vmatprep.subr.mxu0 0.0
        %408 = vmatpush1.msra.mxu0 %v382
        %409 = vmatprep.subr.mxu0 0.0
        %410 = vmatpush1.msra.mxu0 %v381
        %411 = vmatprep.subr.mxu0 0.0
        %412 = vmatpush1.msra.mxu0 %v380
        %413 = vmatprep.subr.mxu0 0.0
        %414 = vmatpush1.msra.mxu0 %v379
        %415 = vmatprep.subr.mxu0 0.0
        %416 = vmatpush2.msra.mxu0 0.0
        %417 = vmatprep.subr.mxu0 0.0
        %418 = vmatpush2.msra.mxu0 0.0
        %419 = vmatprep.subr.mxu0 0.0
        %420 = vmatpush2.msra.mxu0 0.0
        %421 = vmatprep.subr.mxu0 0.0
        %422 = vmatpush2.msra.mxu0 0.0
        %423 = vmatprep.subr.mxu0 0.0
        %424 = vmatpush2.msra.mxu0 0.0
        %425 = vmatprep.subr.mxu0 0.0
        %426 = vmatpush2.msra.mxu0 0.0
        %427 = vmatprep.subr.mxu0 0.0
        %428 = vmatpush2.msra.mxu0 0.0
        %429 = vmatprep.subr.mxu0 0.0
        %430 = vmatpush2.msra.mxu0 0.0
        %431 = vmatprep.subr.mxu0 0.0
        %432 = vmatpush2.msra.mxu0 0.0
        %433 = vmatprep.subr.mxu0 0.0
        %434 = vmatpush2.msra.mxu0 0.0
        %435 = vmatprep.subr.mxu0 0.0
        %436 = vmatpush2.msra.mxu0 0.0
        %437 = vmatprep.subr.mxu0 0.0
        %438 = vmatpush2.msra.mxu0 0.0
        %439 = vmatprep.subr.mxu0 0.0
        %440 = vmatpush2.msra.mxu0 0.0
        %441 = vmatprep.subr.mxu0 0.0
        %442 = vmatpush2.msra.mxu0 0.0
        %443 = vmatprep.subr.mxu0 0.0
        %444 = vmatpush2.msra.mxu0 0.0
        %445 = vmatprep.subr.mxu0 0.0
        %446 = vmatpush2.msra.mxu0 0.0
        %447 = vmatprep.mubr.f32.mxu0 0.0
        %448 = vmatmul.mubr.f32.gmra.mxu0 %v303
        %v449 = vpop.f32.mrf.mxu0
        %v450 = vadd.f32 0.0, %v449
        %v451 = vpop.f32.mrf.mxu0
        %452 = vdwg.mxu0
        %v453 = vmul.f32 %v450, 0.17677669
        %s454 = scalar_lea.vmem %s2, 1
        %v455 = vld [vmem:[%s454] sm:$0x1]
        %v456 = vadd.f32 %v453, %v455
        %s457 = scalar_lea.vmem %s1, 64
        %v458 = vld [vmem:[%s457] sm:$0xff]
        %v459 = vld [vmem:[%s457 + $0x8] sm:$0xff]
        %v460 = vld [vmem:[%s457 + $0x10] sm:$0xff]
        %v461 = vld [vmem:[%s457 + $0x18] sm:$0xff]
        %462 = vmatprep.subr.mxu0 0.0
        %463 = vmatpush1.msra.mxu0 0.0
        %464 = vmatprep.subr.mxu0 0.0
        %465 = vmatpush1.msra.mxu0 0.0
        %466 = vmatprep.subr.mxu0 0.0
        %467 = vmatpush1.msra.mxu0 0.0
        %468 = vmatprep.subr.mxu0 0.0
        %469 = vmatpush1.msra.mxu0 0.0
        %470 = vmatprep.subr.mxu0 0.0
        %471 = vmatpush1.msra.mxu0 0.0
        %472 = vmatprep.subr.mxu0 0.0
        %473 = vmatpush1.msra.mxu0 0.0
        %474 = vmatprep.subr.mxu0 0.0
        %475 = vmatpush1.msra.mxu0 0.0
        %476 = vmatprep.subr.mxu0 0.0
        %477 = vmatpush1.msra.mxu0 0.0
        %478 = vmatprep.subr.mxu0 0.0
        %479 = vmatpush1.msra.mxu0 0.0
        %480 = vmatprep.subr.mxu0 0.0
        %481 = vmatpush1.msra.mxu0 0.0
        %482 = vmatprep.subr.mxu0 0.0
        %483 = vmatpush1.msra.mxu0 0.0
        %484 = vmatprep.subr.mxu0 0.0
        %485 = vmatpush1.msra.mxu0 0.0
        %486 = vmatprep.subr.mxu0 0.0
        %487 = vmatpush1.msra.mxu0 %v461
        %488 = vmatprep.subr.mxu0 0.0
        %489 = vmatpush1.msra.mxu0 %v460
        %490 = vmatprep.subr.mxu0 0.0
        %491 = vmatpush1.msra.mxu0 %v459
        %492 = vmatprep.subr.mxu0 0.0
        %493 = vmatpush1.msra.mxu0 %v458
        %494 = vmatprep.subr.mxu0 0.0
        %495 = vmatpush2.msra.mxu0 0.0
        %496 = vmatprep.subr.mxu0 0.0
        %497 = vmatpush2.msra.mxu0 0.0
        %498 = vmatprep.subr.mxu0 0.0
        %499 = vmatpush2.msra.mxu0 0.0
        %500 = vmatprep.subr.mxu0 0.0
        %501 = vmatpush2.msra.mxu0 0.0
        %502 = vmatprep.subr.mxu0 0.0
        %503 = vmatpush2.msra.mxu0 0.0
        %504 = vmatprep.subr.mxu0 0.0
        %505 = vmatpush2.msra.mxu0 0.0
        %506 = vmatprep.subr.mxu0 0.0
        %507 = vmatpush2.msra.mxu0 0.0
        %508 = vmatprep.subr.mxu0 0.0
        %509 = vmatpush2.msra.mxu0 0.0
        %510 = vmatprep.subr.mxu0 0.0
        %511 = vmatpush2.msra.mxu0 0.0
        %512 = vmatprep.subr.mxu0 0.0
        %513 = vmatpush2.msra.mxu0 0.0
        %514 = vmatprep.subr.mxu0 0.0
        %515 = vmatpush2.msra.mxu0 0.0
        %516 = vmatprep.subr.mxu0 0.0
        %517 = vmatpush2.msra.mxu0 0.0
        %518 = vmatprep.subr.mxu0 0.0
        %519 = vmatpush2.msra.mxu0 0.0
        %520 = vmatprep.subr.mxu0 0.0
        %521 = vmatpush2.msra.mxu0 0.0
        %522 = vmatprep.subr.mxu0 0.0
        %523 = vmatpush2.msra.mxu0 0.0
        %524 = vmatprep.subr.mxu0 0.0
        %525 = vmatpush2.msra.mxu0 0.0
        %526 = vmatprep.mubr.f32.mxu0 0.0
        %527 = vmatmul.mubr.f32.gmra.mxu0 %v303
        %v528 = vpop.f32.mrf.mxu0
        %v529 = vadd.f32 0.0, %v528
        %v530 = vpop.f32.mrf.mxu0
        %531 = vdwg.mxu0
        %v532 = vmul.f32 %v529, 0.17677669
        %s533 = scalar_lea.vmem %s2, 2
        %v534 = vld [vmem:[%s533] sm:$0x1]
        %v535 = vadd.f32 %v532, %v534
        %v536 = vmul.f32 %v377, %v456
        %v537 = vadd.f32 %v536, %v535
        %v538 = vmul.f32 %v537, 0.5
        %v539 = vld [vmem:[%s3] sm:$0x7]
        %v540 = vlaneseq
        %v541 = vshrl.u32 %v540, 7
        %v542 = vsub.s32 0, %v541
        %v543 = vrot.slane %v538, %v542
        %v544 = vmul.f32 %v539, %v543
        %vm545 = vcmask 26624
        %546 = vst.msk [vmem:[#allocation2] sm:$0x7] %vm545, %v544
      $region48: #{tpu_custom_call.1} parent=43 // pred_fallthru
        _
      %v547 = vld [vmem:[#allocation2] sm:$0x7]
      %v548 = vld [vmem:[%s279] sm:$0xff]
      %v549 = vld [vmem:[%s4] sm:$0x7]
      %551 = vset.pattern.permute.xlu0 0
      %552 = vperm.xlu0 %551, %v549
      %v553 = vpop.permute.xlu0 %552
      %v556 = vcombine.high %v548, %v548
      %vm557 = vcmask 31744
      %v559 = vsel %vm557, %v547, 0
      %vm561 = vcmask 1043456
      %v562 = vsel %vm561, %v548, 0
      %v564 = vsel %vm561, %v556, 0
      %566 = vmatprep.subr.mxu0 0.0
      %567 = vmatpush1.msra.mxu0 0.0
      %568 = vmatprep.subr.mxu0 0.0
      %569 = vmatpush1.msra.mxu0 0.0
      %570 = vmatprep.subr.mxu0 0.0
      %571 = vmatpush1.msra.mxu0 0.0
      %572 = vmatprep.subr.mxu0 0.0
      %573 = vmatpush1.msra.mxu0 0.0
      %574 = vmatprep.subr.mxu0 0.0
      %575 = vmatpush1.msra.mxu0 0.0
      %576 = vmatprep.subr.mxu0 0.0
      %577 = vmatpush1.msra.mxu0 0.0
      %578 = vmatprep.subr.mxu0 0.0
      %579 = vmatpush1.msra.mxu0 0.0
      %580 = vmatprep.subr.mxu0 0.0
      %581 = vmatpush1.msra.mxu0 0.0
      %582 = vmatprep.subr.mxu0 0.0
      %583 = vmatpush1.msra.mxu0 0.0
      %584 = vmatprep.subr.mxu0 0.0
      %585 = vmatpush1.msra.mxu0 0.0
      %586 = vmatprep.subr.mxu0 0.0
      %587 = vmatpush1.msra.mxu0 0.0
      %588 = vmatprep.subr.mxu0 0.0
      %589 = vmatpush1.msra.mxu0 0.0
      %590 = vmatprep.subr.mxu0 0.0
      %591 = vmatpush1.msra.mxu0 0.0
      %592 = vmatprep.subr.mxu0 0.0
      %593 = vmatpush1.msra.mxu0 0.0
      %594 = vmatprep.subr.mxu0 0.0
      %595 = vmatpush1.msra.mxu0 0.0
      %596 = vmatprep.subr.mxu0 %v564
      %597 = vmatpush1.msra.mxu0 %v562
      %598 = vmatprep.subr.mxu0 0.0
      %599 = vmatpush2.msra.mxu0 0.0
      %600 = vmatprep.subr.mxu0 0.0
      %601 = vmatpush2.msra.mxu0 0.0
      %602 = vmatprep.subr.mxu0 0.0
      %603 = vmatpush2.msra.mxu0 0.0
      %604 = vmatprep.subr.mxu0 0.0
      %605 = vmatpush2.msra.mxu0 0.0
      %606 = vmatprep.subr.mxu0 0.0
      %607 = vmatpush2.msra.mxu0 0.0
      %608 = vmatprep.subr.mxu0 0.0
      %609 = vmatpush2.msra.mxu0 0.0
      %610 = vmatprep.subr.mxu0 0.0
      %611 = vmatpush2.msra.mxu0 0.0
      %612 = vmatprep.subr.mxu0 0.0
      %613 = vmatpush2.msra.mxu0 0.0
      %614 = vmatprep.subr.mxu0 0.0
      %615 = vmatpush2.msra.mxu0 0.0
      %616 = vmatprep.subr.mxu0 0.0
      %617 = vmatpush2.msra.mxu0 0.0
      %618 = vmatprep.subr.mxu0 0.0
      %619 = vmatpush2.msra.mxu0 0.0
      %620 = vmatprep.subr.mxu0 0.0
      %621 = vmatpush2.msra.mxu0 0.0
      %622 = vmatprep.subr.mxu0 0.0
      %623 = vmatpush2.msra.mxu0 0.0
      %624 = vmatprep.subr.mxu0 0.0
      %625 = vmatpush2.msra.mxu0 0.0
      %626 = vmatprep.subr.mxu0 0.0
      %627 = vmatpush2.msra.mxu0 0.0
      %628 = vmatprep.subr.mxu0 0.0
      %629 = vmatpush2.msra.mxu0 0.0
      %630 = vmatprep.mubr.f32.mxu0 0.0
      %631 = vmatmul.mubr.f32.gmra.mxu0 %v559
      %v632 = vpop.f32.mrf.mxu0
      %v633 = vadd.f32 %v553, %v632
      %v634 = vpop.f32.mrf.mxu0
      %v635 = vadd.f32 %v553, %v634
      %636 = vdwg.mxu0
      %v639 = vcombine.low %v633, %v635
      %641 = vst [vmem:[%s289] sm:$0x77] %v639
      %s642 = smul.u32 2, %s22
      %p643 = scmp.lt.s32.totalorder %s21, 1
      %s644 = scalar_select %p643, %s21, 1
      %p645 = scmp.lt.s32.totalorder %s642, 1
      %s646 = scalar_select %p645, %s642, 1
      %s647 = smul.addr %s644, 2
      %s648 = sadd.s32 %s646, %s647
      %s649 = smul.addr %s648, 4
      %s650 = scalar_lea.vmem %s6, %s649
      // Predicated region
      $region49: #{tpu_custom_call.1} parent=43 // pred_check
        %p651 = pneg %p182
      $region50: #{tpu_custom_call.1} parent=43 // pred_check_branch
        %653 = sbr.rel (%p651) target = $region52
      $region51: #{tpu_custom_call.1} parent=43 // pred_region
        %s654 = smul.u32 2, %s22
      $region52: #{tpu_custom_call.1} parent=43 // pred_fallthru
        _
    $region44: #{tpu_custom_call.1} parent=5 // pred_fallthru
      _
    %p655 = scmp.le.s32.totalorder 2, %s12
    // Predicated region
    $region53: #{tpu_custom_call.1} parent=5 // pred_check
      %p656 = pneg %p655
    $region54: #{tpu_custom_call.1} parent=5 // pred_check_branch
      %658 = sbr.rel (%p656) target = $region56
    $region55: #{tpu_custom_call.1} parent=5 // pred_region
      %s659 = ssub.s32 %s12, 2
      // Predicated region
      $region57: #{tpu_custom_call.1} parent=55 // pred_check
        %p660 = pneg %p188
      $region58: #{tpu_custom_call.1} parent=55 // pred_check_branch
        %662 = sbr.rel (%p660) target = $region60
      $region59: #{tpu_custom_call.1} parent=55 // pred_region
        %s663 = smul.u32 2, %s24
        %p664 = scmp.lt.s32.totalorder %s23, 1
        %s665 = scalar_select %p664, %s23, 1
        %p666 = scmp.lt.s32.totalorder %s663, 1
        %s667 = scalar_select %p666, %s663, 1
        %s668 = smul.addr %s665, 2
        %s669 = sadd.s32 %s667, %s668
        %s670 = smul.addr %s669, 4
        %s671 = scalar_lea.vmem %s6, %s670
      $region60: #{tpu_custom_call.1} parent=55 // pred_fallthru
        _
    $region56: #{tpu_custom_call.1} parent=5 // pred_fallthru
      _
  $region6: #{tpu_custom_call.1} parent=0 // loop_footer
    %s16 = sadd.s32 1, %s12
  $region7: #{tpu_custom_call.1} parent=0 // loop_footer_branch
    %11 = sbr.rel target = $region3
  $region8: #{tpu_custom_call.1} parent=0 // loop_exit
    _

</llo_original>
